<compile_context>
chip_gen: v6e
topology: v6e:2x2x1
jax: 0.10.0
libtpu: 0.0.40
codegen_flags: <defaults>
</compile_context>

<pallas_src>
import functools
import math

import jax
import jax.numpy as jnp
from jax import lax
from jax.experimental import pallas as pl
from jax.experimental.pallas import tpu as pltpu


def _dropout_keep_mask(shape, row_offset, seed_scalar, keep_thresh):
    """uint32 counter-hash -> boolean keep mask with P(keep) = keep_thresh / 2^32."""
    rows = lax.broadcasted_iota(jnp.int32, shape, 0) + row_offset
    cols = lax.broadcasted_iota(jnp.int32, shape, 1)
    idx = (rows * shape[1] + cols).astype(jnp.uint32)
    s = seed_scalar.astype(jnp.uint32)
    # lowbias32-style mixer (mul / xor-shift); uint32 arithmetic wraps mod 2^32.
    u = idx * jnp.uint32(0x9E3779B1) + s * jnp.uint32(0x85EBCA77)
    u = u ^ (u >> jnp.uint32(16))
    u = u * jnp.uint32(0x7FEB352D)
    u = u ^ (u >> jnp.uint32(15))
    u = u * jnp.uint32(0x846CA68B)
    u = u ^ (u >> jnp.uint32(16))
    return u < jnp.uint32(keep_thresh)


def resblock_kernel(seed_ref, x_ref, w1t_ref, b1_ref, w2t_ref, b2b_ref, o_ref,
                    *, training: bool, drop_p: float):
    tm, d = x_ref.shape
    x = x_ref[...].astype(jnp.float32)          # residual path stays in f32

    # relu(fc1(x)) — bf16 MXU inputs, f32 accumulation.
    h = jnp.dot(x.astype(jnp.bfloat16), w1t_ref[...],
                preferred_element_type=jnp.float32) + b1_ref[...]
    h = jnp.maximum(h, 0.0)

    # fc2(h) + x + (b2 + bias)   (bias was folded into b2 in the wrapper)
    out = jnp.dot(h.astype(jnp.bfloat16), w2t_ref[...],
                  preferred_element_type=jnp.float32) + b2b_ref[...]
    out = out + x

    # dropout(p=drop_p) — training only; branch is Python-static.
    if training and drop_p > 0.0:
        if drop_p >= 1.0:
            out = jnp.zeros_like(out)
        else:
            keep_thresh = min(int((1.0 - drop_p) * 4294967296.0), 4294967295)
            keep = _dropout_keep_mask((tm, d), pl.program_id(0) * tm,
                                      seed_ref[0], keep_thresh)
            out = jnp.where(keep, out * (1.0 / (1.0 - drop_p)), 0.0)

    o_ref[...] = jnp.maximum(out, 0.0).astype(o_ref.dtype)


def resblock_forward(x, prepared, *, seed=0, training=True, drop_p=0.5, tm=256):
    """x: (N, D) float32.  prepared: dict from prepare_params (w1t/w2t bf16, b1, b2_bias)."""
    N, D = x.shape

    # Large row tile (MXU utilization + fewer grid steps); fall back gracefully for small N.
    if N <= tm or N % 8 != 0:
        tm_eff = N
    else:
        tm_eff = tm if N % tm == 0 else math.gcd(N, tm)   # stays a multiple of 8

    seed_arr = jnp.array([seed], dtype=jnp.int32)
    kernel = functools.partial(resblock_kernel, training=training, drop_p=drop_p)

    full = lambda i, seed_ref: (0, 0)
    rows = lambda i, seed_ref: (i, 0)

    return pl.pallas_call(
        kernel,
        out_shape=jax.ShapeDtypeStruct((N, D), x.dtype),
        grid_spec=pltpu.PrefetchScalarGridSpec(
            num_scalar_prefetch=1,
            grid=(N // tm_eff,),
            in_specs=[
                pl.BlockSpec((tm_eff, D), rows),   # x
                pl.BlockSpec((D, D), full),        # w1^T  (bf16, grid-invariant / resident)
                pl.BlockSpec((1, D), full),        # b1
                pl.BlockSpec((D, D), full),        # w2^T  (bf16, grid-invariant / resident)
                pl.BlockSpec((1, D), full),        # b2 + bias (folded)
            ],
            out_specs=pl.BlockSpec((tm_eff, D), rows),
        ),
        compiler_params=pltpu.CompilerParams(
            # Row blocks are independent (dropout hash uses global element indices),
            # so the grid axis can shard across TensorCores (v7x megacore).
            dimension_semantics=("parallel",),
            vmem_limit_bytes=64 * 1024 * 1024,
        ),
        # TODO(synk): for very large D (>= ~1536) single-buffer / K-tile the weight
        # blocks to stay within v7x's 64 MiB VMEM.
    )(seed_arr, x, prepared["w1t"], prepared["b1"], prepared["w2t"], prepared["b2_bias"])


def init_params(key, dim):
    """PyTorch-layout parameters (as nn.Linear would initialize them)."""
    k1, k2, k3, k4 = jax.random.split(key, 4)
    bound = 1.0 / jnp.sqrt(dim)
    return {
        "w1": jax.random.uniform(k1, (dim, dim), jnp.float32, -bound, bound),
        "b1": jax.random.uniform(k2, (dim,), jnp.float32, -bound, bound),
        "w2": jax.random.uniform(k3, (dim, dim), jnp.float32, -bound, bound),
        "b2": jax.random.uniform(k4, (dim,), jnp.float32, -bound, bound),
        "bias": jnp.ones((dim,), jnp.float32),   # nn.Parameter(torch.ones(dim))
    }


def prepare_params(params):
    """One-time glue: pre-transpose weights, cast to bf16, fold bias into b2."""
    dim = params["b1"].shape[0]
    return {
        "w1t": params["w1"].T.astype(jnp.bfloat16),
        "w2t": params["w2"].T.astype(jnp.bfloat16),
        "b1": params["b1"].reshape(1, dim),
        "b2_bias": (params["b2"] + params["bias"]).reshape(1, dim),
    }


if __name__ == "__main__":
    key = jax.random.PRNGKey(0)
    kx, kp = jax.random.split(key)

    N, D = 16, 128   # small demo shapes (module default dim=512 also works)
    x = jax.random.normal(kx, (N, D), jnp.float32)
    params = init_params(kp, D)
    prepared = prepare_params(params)   # done once, not per forward

    # training mode: shape / dtype / relu non-negativity sanity
    out = jax.block_until_ready(resblock_forward(x, prepared, seed=0, training=True))
    assert out.shape == (N, D) and out.dtype == jnp.float32
    assert bool(jnp.all(out >= 0.0))

    # eval mode: compare against a pure-JAX reference mirroring the kernel's
    # bf16-matmul / f32-accumulate numerics.
    out_eval = jax.block_until_ready(resblock_forward(x, prepared, training=False))
    h_ref = jnp.maximum(
        jnp.dot(x.astype(jnp.bfloat16), prepared["w1t"],
                preferred_element_type=jnp.float32) + params["b1"][None, :], 0.0)
    o_ref = (jnp.dot(h_ref.astype(jnp.bfloat16), prepared["w2t"],
                     preferred_element_type=jnp.float32)
             + params["b2"][None, :] + params["bias"][None, :] + x)
    ref = jnp.maximum(o_ref, 0.0)
    assert bool(jnp.allclose(out_eval, ref, atol=1e-2, rtol=1e-2))

    print("KERNEL_OK")
</pallas_src>

<mosaic_0001>
module attributes {stable_mosaic.version = 11 : i64} {
  func.func @resblock_kernel(%arg0: i32, %arg1: memref<1xi32, #tpu.memory_space<smem>>, %arg2: memref<16x128xf32, #tpu.memory_space<vmem>>, %arg3: memref<128x128xbf16, #tpu.memory_space<vmem>>, %arg4: memref<1x128xf32, #tpu.memory_space<vmem>>, %arg5: memref<128x128xbf16, #tpu.memory_space<vmem>>, %arg6: memref<1x128xf32, #tpu.memory_space<vmem>>, %arg7: memref<16x128xf32, #tpu.memory_space<vmem>>) attributes {dimension_semantics = [#tpu.dimension_semantics<parallel>], iteration_bounds = array<i64: 1>, scalar_prefetch = 1 : i64, scratch_operands = 0 : i64, tpu.core_type = #tpu.core_type<tc>, window_params = [{transform_indices = @transform_0, window_bounds = array<i64: 16, 128>}, {pipeline_mode = #tpu.pipeline_mode<synchronous>, transform_indices = @transform_1, window_bounds = array<i64: 128, 128>}, {pipeline_mode = #tpu.pipeline_mode<synchronous>, transform_indices = @transform_2, window_bounds = array<i64: 1, 128>}, {pipeline_mode = #tpu.pipeline_mode<synchronous>, transform_indices = @transform_3, window_bounds = array<i64: 128, 128>}, {pipeline_mode = #tpu.pipeline_mode<synchronous>, transform_indices = @transform_4, window_bounds = array<i64: 1, 128>}, {transform_indices = @transform_5, window_bounds = array<i64: 16, 128>}]} {
    %c0 = arith.constant 0 : index
    %c0_0 = arith.constant 0 : index
    %0 = vector.load %arg2[%c0, %c0_0] : memref<16x128xf32, #tpu.memory_space<vmem>>, vector<16x128xf32>
    %1 = arith.truncf %0 : vector<16x128xf32> to vector<16x128xbf16>
    %c0_1 = arith.constant 0 : index
    %c0_2 = arith.constant 0 : index
    %2 = vector.load %arg3[%c0_1, %c0_2] : memref<128x128xbf16, #tpu.memory_space<vmem>>, vector<128x128xbf16>
    %cst = arith.constant dense<0.000000e+00> : vector<16x128xf32>
    %3 = tpu.matmul %1, %2, %cst {dimension_numbers = #tpu.dot_dimension_numbers<[1], [0], [0], [1], [0, 0, 1, 1], [], []>} : vector<16x128xbf16>, vector<128x128xbf16>, vector<16x128xf32> -> vector<16x128xf32>
    %c0_3 = arith.constant 0 : index
    %c0_4 = arith.constant 0 : index
    %4 = vector.load %arg4[%c0_3, %c0_4] : memref<1x128xf32, #tpu.memory_space<vmem>>, vector<1x128xf32>
    %5 = vector.broadcast %4 : vector<1x128xf32> to vector<16x128xf32>
    %6 = arith.addf %3, %5 : vector<16x128xf32>
    %cst_5 = arith.constant 0.000000e+00 : f32
    %7 = vector.broadcast %cst_5 : f32 to vector<16x128xf32>
    %8 = arith.maximumf %6, %7 : vector<16x128xf32>
    %9 = arith.truncf %8 : vector<16x128xf32> to vector<16x128xbf16>
    %c0_6 = arith.constant 0 : index
    %c0_7 = arith.constant 0 : index
    %10 = vector.load %arg5[%c0_6, %c0_7] : memref<128x128xbf16, #tpu.memory_space<vmem>>, vector<128x128xbf16>
    %cst_8 = arith.constant dense<0.000000e+00> : vector<16x128xf32>
    %11 = tpu.matmul %9, %10, %cst_8 {dimension_numbers = #tpu.dot_dimension_numbers<[1], [0], [0], [1], [0, 0, 1, 1], [], []>} : vector<16x128xbf16>, vector<128x128xbf16>, vector<16x128xf32> -> vector<16x128xf32>
    %c0_9 = arith.constant 0 : index
    %c0_10 = arith.constant 0 : index
    %12 = vector.load %arg6[%c0_9, %c0_10] : memref<1x128xf32, #tpu.memory_space<vmem>>, vector<1x128xf32>
    %13 = vector.broadcast %12 : vector<1x128xf32> to vector<16x128xf32>
    %14 = arith.addf %11, %13 : vector<16x128xf32>
    %15 = arith.addf %14, %0 : vector<16x128xf32>
    %c16_i32 = arith.constant 16 : i32
    %16 = arith.muli %arg0, %c16_i32 : i32
    %c0_11 = arith.constant 0 : index
    %17 = memref.load %arg1[%c0_11] : memref<1xi32, #tpu.memory_space<smem>>
    %18 = tpu.iota {dimensions = array<i32: 0>} : vector<16x128xi32>
    %19 = vector.broadcast %16 : i32 to vector<16x128xi32>
    %20 = arith.addi %18, %19 : vector<16x128xi32>
    %21 = tpu.iota {dimensions = array<i32: 1>} : vector<16x128xi32>
    %c128_i32 = arith.constant 128 : i32
    %22 = vector.broadcast %c128_i32 : i32 to vector<16x128xi32>
    %23 = arith.muli %20, %22 : vector<16x128xi32>
    %24 = arith.addi %23, %21 : vector<16x128xi32>
    %c-1640531535_i32 = arith.constant -1640531535 : i32
    %25 = vector.broadcast %c-1640531535_i32 : i32 to vector<16x128xi32>
    %26 = arith.muli %24, %25 : vector<16x128xi32>
    %c-2048144777_i32 = arith.constant -2048144777 : i32
    %27 = arith.muli %17, %c-2048144777_i32 : i32
    %28 = vector.broadcast %27 : i32 to vector<16x128xi32>
    %29 = arith.addi %26, %28 : vector<16x128xi32>
    %c16_i32_12 = arith.constant 16 : i32
    %30 = vector.broadcast %c16_i32_12 : i32 to vector<16x128xi32>
    %31 = arith.shrui %29, %30 : vector<16x128xi32>
    %32 = arith.xori %29, %31 : vector<16x128xi32>
    %c2146121005_i32 = arith.constant 2146121005 : i32
    %33 = vector.broadcast %c2146121005_i32 : i32 to vector<16x128xi32>
    %34 = arith.muli %32, %33 : vector<16x128xi32>
    %c15_i32 = arith.constant 15 : i32
    %35 = vector.broadcast %c15_i32 : i32 to vector<16x128xi32>
    %36 = arith.shrui %34, %35 : vector<16x128xi32>
    %37 = arith.xori %34, %36 : vector<16x128xi32>
    %c-2073254261_i32 = arith.constant -2073254261 : i32
    %38 = vector.broadcast %c-2073254261_i32 : i32 to vector<16x128xi32>
    %39 = arith.muli %37, %38 : vector<16x128xi32>
    %c16_i32_13 = arith.constant 16 : i32
    %40 = vector.broadcast %c16_i32_13 : i32 to vector<16x128xi32>
    %41 = arith.shrui %39, %40 : vector<16x128xi32>
    %42 = arith.xori %39, %41 : vector<16x128xi32>
    %c-2147483648_i32 = arith.constant -2147483648 : i32
    %43 = vector.broadcast %c-2147483648_i32 : i32 to vector<16x128xi32>
    %44 = arith.cmpi ult, %42, %43 : vector<16x128xi32>
    %cst_14 = arith.constant 2.000000e+00 : f32
    %45 = vector.broadcast %cst_14 : f32 to vector<16x128xf32>
    %46 = arith.mulf %15, %45 : vector<16x128xf32>
    %cst_15 = arith.constant 0.000000e+00 : f32
    %47 = vector.broadcast %cst_15 : f32 to vector<16x128xf32>
    %48 = arith.select %44, %46, %47 : vector<16x128xi1>, vector<16x128xf32>
    %cst_16 = arith.constant 0.000000e+00 : f32
    %49 = vector.broadcast %cst_16 : f32 to vector<16x128xf32>
    %50 = arith.maximumf %48, %49 : vector<16x128xf32>
    %c0_17 = arith.constant 0 : index
    %c0_18 = arith.constant 0 : index
    %51 = vector.load %arg7[%c0_17, %c0_18] : memref<16x128xf32, #tpu.memory_space<vmem>>, vector<16x128xf32>
    tpu.vector_store %arg7[%c0_17, %c0_18], %50 {strides = array<i32>} : memref<16x128xf32, #tpu.memory_space<vmem>>, vector<16x128xf32>,
    return
  }
  func.func @transform_0(%arg0: i32, %arg1: memref<1xi32, #tpu.memory_space<smem>>) -> (i32, i32) {
    %c0_i32 = arith.constant 0 : i32
    %c0_i32_0 = arith.constant 0 : i32
    return %arg0, %c0_i32 : i32, i32
  }
  func.func @transform_1(%arg0: i32, %arg1: memref<1xi32, #tpu.memory_space<smem>>) -> (i32, i32) {
    %c0_i32 = arith.constant 0 : i32
    %c0_i32_0 = arith.constant 0 : i32
    %c0_i32_1 = arith.constant 0 : i32
    return %c0_i32, %c0_i32_0 : i32, i32
  }
  func.func @transform_2(%arg0: i32, %arg1: memref<1xi32, #tpu.memory_space<smem>>) -> (i32, i32) {
    %c0_i32 = arith.constant 0 : i32
    %c0_i32_0 = arith.constant 0 : i32
    %c0_i32_1 = arith.constant 0 : i32
    return %c0_i32, %c0_i32_0 : i32, i32
  }
  func.func @transform_3(%arg0: i32, %arg1: memref<1xi32, #tpu.memory_space<smem>>) -> (i32, i32) {
    %c0_i32 = arith.constant 0 : i32
    %c0_i32_0 = arith.constant 0 : i32
    %c0_i32_1 = arith.constant 0 : i32
    return %c0_i32, %c0_i32_0 : i32, i32
  }
  func.func @transform_4(%arg0: i32, %arg1: memref<1xi32, #tpu.memory_space<smem>>) -> (i32, i32) {
    %c0_i32 = arith.constant 0 : i32
    %c0_i32_0 = arith.constant 0 : i32
    %c0_i32_1 = arith.constant 0 : i32
    return %c0_i32, %c0_i32_0 : i32, i32
  }
  func.func @transform_5(%arg0: i32, %arg1: memref<1xi32, #tpu.memory_space<smem>>) -> (i32, i32) {
    %c0_i32 = arith.constant 0 : i32
    %c0_i32_0 = arith.constant 0 : i32
    return %arg0, %c0_i32 : i32, i32
  }
}

</mosaic_0001>

<llo_original>
// kernel: tpu_custom_call.1
$region0: #{tpu_custom_call.1}
  #allocation0 [shape = 'u32[]', space=smem, size = 0x4, offset = 0x4, fixed_abs, tag = 'smem constant byte address 0x4 - core index']
  #allocation1 [shape = 'u32[144,128]{1,0:T(1,128)}', space=vmem, size = 0x12000, scoped, tag = 'internal scratch']
  #allocation2 [shape = 's32[1]{0}', space=sflag, size = 0x4, scoped, tag = 'scoped memory for tpu_custom_call.1']
  #allocation3 [shape = 's32[1]{0:T(128)S(6)}', space=smem, size = 0x200, scoped, tag = 'prefetched SMEM operand 0']
  %s0 = inlined_call_operand.<no memory space> [shape: s32[1], index: 0, kind: input, shape index: {}]
  %s1 = inlined_call_operand.hbm [shape: f32[16,128], index: 1, kind: input, shape index: {}]
  %s2 = inlined_call_operand.hbm [shape: bf16[128,128], index: 2, kind: input, shape index: {}]
  %s3 = inlined_call_operand.vmem [shape: f32[1,128], index: 3, kind: input, shape index: {}]
  %s4 = inlined_call_operand.hbm [shape: bf16[128,128], index: 4, kind: input, shape index: {}]
  %s5 = inlined_call_operand.vmem [shape: f32[1,128], index: 5, kind: input, shape index: {}]
  %s6 = inlined_call_operand.hbm [shape: f32[16,128], index: 6, kind: output, shape index: {}]
  %s7 = sld [smem:[#allocation0]]
  $region42: #{tpu_custom_call.1} parent=0
    _
  %s9 = ssub.s32 1, %s7
  %s10 = scalar_select 0, %s9, %s7
  %11 = sst [smem:[#allocation3]] %s0
  $region1: #{tpu_custom_call.1} parent=0
    #allocation4 [shape = 'u8[8192]{0}', space=vmem, size = 0x2000, scoped, tag = 'input window, operand 1, single buffered']
    #allocation5 [shape = 's32[1]{0}', space=sflag, size = 0x4, scoped, tag = 'scoped memory for tpu_custom_call.1']
    #allocation6 [shape = 's32[1]{0}', space=sflag, size = 0x4, scoped, tag = 'scoped memory for tpu_custom_call.1']
    #allocation7 [shape = 'u8[32768]{0}', space=vmem, size = 0x8000, scoped, tag = 'input window, operand 2, single buffered']
    #allocation8 [shape = 's32[1]{0}', space=sflag, size = 0x4, scoped, tag = 'scoped memory for tpu_custom_call.1']
    #allocation9 [shape = 'u8[32768]{0}', space=vmem, size = 0x8000, scoped, tag = 'input window, operand 4, single buffered']
    #allocation10 [shape = 'u8[8192]{0}', space=vmem, size = 0x2000, scoped, tag = 'output window, operand 0, single buffered']
    %12 = vsyncpa [#allocation5], 0
    %13 = vsyncpa [#allocation8], 0
    %14 = vsyncpa [#allocation6], 0
    // Predicated region
    $region2: #{tpu_custom_call.1} parent=1 // pred_check
      _
    $region3: #{tpu_custom_call.1} parent=1 // pred_check_branch
      %16 = sbr.rel (0) target = $region5
    $region4: #{tpu_custom_call.1} parent=1 // pred_region
      %s18 = ssub.s32 256, 256
      %19 = vsyncadd [#allocation5], %s18
      %s20 = sshll.u32 [#allocation4], 4
      %s21 = int_to_ptr.vmem [resolvable:$true] %s20
      %26 = dma.hbm_to_vmem [thread:$0]  %s1, 256, %s21, [#allocation5], 128, 128, 8
    $region5: #{tpu_custom_call.1} parent=1 // pred_fallthru
      _
    // Predicated region
    $region6: #{tpu_custom_call.1} parent=1 // pred_check
      _
    $region7: #{tpu_custom_call.1} parent=1 // pred_check_branch
      %28 = sbr.rel (0) target = $region9
    $region8: #{tpu_custom_call.1} parent=1 // pred_region
      %s30 = ssub.s32 1024, 1024
      %31 = vsyncadd [#allocation8], %s30
      %s32 = sshll.u32 [#allocation7], 4
      %s33 = int_to_ptr.vmem [resolvable:$true] %s32
      %38 = dma.hbm_to_vmem [thread:$0]  %s2, 1024, %s33, [#allocation8], 64, 64, 4
    $region9: #{tpu_custom_call.1} parent=1 // pred_fallthru
      _
    // Predicated region
    $region10: #{tpu_custom_call.1} parent=1 // pred_check
      _
    $region11: #{tpu_custom_call.1} parent=1 // pred_check_branch
      %40 = sbr.rel (0) target = $region13
    $region12: #{tpu_custom_call.1} parent=1 // pred_region
      _
    $region13: #{tpu_custom_call.1} parent=1 // pred_fallthru
      _
    // Predicated region
    $region14: #{tpu_custom_call.1} parent=1 // pred_check
      _
    $region15: #{tpu_custom_call.1} parent=1 // pred_check_branch
      %42 = sbr.rel (0) target = $region17
    $region16: #{tpu_custom_call.1} parent=1 // pred_region
      %s44 = ssub.s32 1024, 1024
      %45 = vsyncadd [#allocation8], %s44
      %s46 = sshll.u32 [#allocation9], 4
      %s47 = int_to_ptr.vmem [resolvable:$true] %s46
      %52 = dma.hbm_to_vmem [thread:$0]  %s4, 1024, %s47, [#allocation8], 64, 64, 4
    $region17: #{tpu_custom_call.1} parent=1 // pred_fallthru
      _
    // Predicated region
    $region18: #{tpu_custom_call.1} parent=1 // pred_check
      _
    $region19: #{tpu_custom_call.1} parent=1 // pred_check_branch
      %54 = sbr.rel (0) target = $region21
    $region20: #{tpu_custom_call.1} parent=1 // pred_region
      _
    $region21: #{tpu_custom_call.1} parent=1 // pred_fallthru
      _
    // Predicated region
    $region22: #{tpu_custom_call.1} parent=1 // pred_check
      _
    $region23: #{tpu_custom_call.1} parent=1 // pred_check_branch
      %56 = sbr.rel (0) target = $region25
    $region24: #{tpu_custom_call.1} parent=1 // pred_region
      %57 = dma.done [#allocation5], 256
    $region25: #{tpu_custom_call.1} parent=1 // pred_fallthru
      _
    // Predicated region
    $region26: #{tpu_custom_call.1} parent=1 // pred_check
      _
    $region27: #{tpu_custom_call.1} parent=1 // pred_check_branch
      %59 = sbr.rel (0) target = $region29
    $region28: #{tpu_custom_call.1} parent=1 // pred_region
      %60 = dma.done [#allocation8], 1024
    $region29: #{tpu_custom_call.1} parent=1 // pred_fallthru
      _
    // Predicated region
    $region30: #{tpu_custom_call.1} parent=1 // pred_check
      _
    $region31: #{tpu_custom_call.1} parent=1 // pred_check_branch
      %62 = sbr.rel (0) target = $region33
    $region32: #{tpu_custom_call.1} parent=1 // pred_region
      %63 = dma.done [#allocation8], 1024
    $region33: #{tpu_custom_call.1} parent=1 // pred_fallthru
      _
    %v65 = vld [vmem:[#allocation4] sm:$0xff]
    %v66 = vld [vmem:[#allocation4 + $0x8] sm:$0xff]
    %v67 = vpack.c.bf16 %v66, %v65
    %v68 = vld [vmem:[#allocation7] sm:$0xf]
    %v69 = vld [vmem:[#allocation7 + $0x4] sm:$0xf]
    %v70 = vld [vmem:[#allocation7 + $0x8] sm:$0xf]
    %v71 = vld [vmem:[#allocation7 + $0xc] sm:$0xf]
    %v72 = vld [vmem:[#allocation7 + $0x10] sm:$0xf]
    %v73 = vld [vmem:[#allocation7 + $0x14] sm:$0xf]
    %v74 = vld [vmem:[#allocation7 + $0x18] sm:$0xf]
    %v75 = vld [vmem:[#allocation7 + $0x1c] sm:$0xf]
    %v76 = vld [vmem:[#allocation7 + $0x20] sm:$0xf]
    %v77 = vld [vmem:[#allocation7 + $0x24] sm:$0xf]
    %v78 = vld [vmem:[#allocation7 + $0x28] sm:$0xf]
    %v79 = vld [vmem:[#allocation7 + $0x2c] sm:$0xf]
    %v80 = vld [vmem:[#allocation7 + $0x30] sm:$0xf]
    %v81 = vld [vmem:[#allocation7 + $0x34] sm:$0xf]
    %v82 = vld [vmem:[#allocation7 + $0x38] sm:$0xf]
    %v83 = vld [vmem:[#allocation7 + $0x3c] sm:$0xf]
    %v84 = vld [vmem:[%s3] sm:$0x1]
    %v86 = vlaneseq
    %v87 = vshrl.u32 %v86, 7
    %v88 = vsub.s32 0, %v87
    %v89 = vrot.slane %v84, %v88
    %v107 = vunpack.c.l.b16 %v68
    %v108 = vunpack.c.l.b16 %v69
    %v109 = vunpack.c.l.b16 %v70
    %v110 = vunpack.c.l.b16 %v71
    %v111 = vunpack.c.l.b16 %v72
    %v112 = vunpack.c.l.b16 %v73
    %v113 = vunpack.c.l.b16 %v74
    %v114 = vunpack.c.l.b16 %v75
    %v115 = vunpack.c.l.b16 %v76
    %v116 = vunpack.c.l.b16 %v77
    %v117 = vunpack.c.l.b16 %v78
    %v118 = vunpack.c.l.b16 %v79
    %v119 = vunpack.c.l.b16 %v80
    %v120 = vunpack.c.l.b16 %v81
    %v121 = vunpack.c.l.b16 %v82
    %v122 = vunpack.c.l.b16 %v83
    %v123 = vpack.c.b16 %v108, %v107
    %v124 = vpack.c.b16 %v110, %v109
    %v125 = vpack.c.b16 %v112, %v111
    %v126 = vpack.c.b16 %v114, %v113
    %v127 = vpack.c.b16 %v116, %v115
    %v128 = vpack.c.b16 %v118, %v117
    %v129 = vpack.c.b16 %v120, %v119
    %v130 = vpack.c.b16 %v122, %v121
    %139 = vmatprep.subr.bf16.mxu0 0
    %140 = vmatpush1.bf16.msra.mxu0 %v130
    %141 = vmatprep.subr.bf16.mxu0 0
    %142 = vmatpush1.bf16.msra.mxu0 %v129
    %143 = vmatprep.subr.bf16.mxu0 0
    %144 = vmatpush1.bf16.msra.mxu0 %v128
    %145 = vmatprep.subr.bf16.mxu0 0
    %146 = vmatpush1.bf16.msra.mxu0 %v127
    %147 = vmatprep.subr.bf16.mxu0 0
    %148 = vmatpush1.bf16.msra.mxu0 %v126
    %149 = vmatprep.subr.bf16.mxu0 0
    %150 = vmatpush1.bf16.msra.mxu0 %v125
    %151 = vmatprep.subr.bf16.mxu0 0
    %152 = vmatpush1.bf16.msra.mxu0 %v124
    %153 = vmatprep.subr.bf16.mxu0 0
    %154 = vmatpush1.bf16.msra.mxu0 %v123
    %155 = vmatprep.subr.bf16.mxu0 0
    %156 = vmatpush2.bf16.msra.mxu0 0
    %157 = vmatprep.subr.bf16.mxu0 0
    %158 = vmatpush2.bf16.msra.mxu0 0
    %159 = vmatprep.subr.bf16.mxu0 0
    %160 = vmatpush2.bf16.msra.mxu0 0
    %161 = vmatprep.subr.bf16.mxu0 0
    %162 = vmatpush2.bf16.msra.mxu0 0
    %163 = vmatprep.subr.bf16.mxu0 0
    %164 = vmatpush2.bf16.msra.mxu0 0
    %165 = vmatprep.subr.bf16.mxu0 0
    %166 = vmatpush2.bf16.msra.mxu0 0
    %167 = vmatprep.subr.bf16.mxu0 0
    %168 = vmatpush2.bf16.msra.mxu0 0
    %169 = vmatprep.subr.bf16.mxu0 0
    %170 = vmatpush2.bf16.msra.mxu0 0
    %171 = vmatprep.mubr.bf16.mxu0 0
    %172 = vmatmul.mubr.bf16.gmra.mxu0 %v67
    %v173 = vpop.f32.mrf.mxu0
    %v174 = vadd.f32 %v89, %v173
    %v175 = vpop.f32.mrf.mxu0
    %v176 = vpop.f32.mrf.mxu0
    %v177 = vadd.f32 %v89, %v176
    %v178 = vpop.f32.mrf.mxu0
    %179 = vdwg.mxu0
    %v180 = vmax.f32 %v174, 0.0
    %v181 = vmax.f32 %v177, 0.0
    %v182 = vpack.c.bf16 %v181, %v180
    %v183 = vld [vmem:[#allocation9] sm:$0xf]
    %v184 = vld [vmem:[#allocation9 + $0x4] sm:$0xf]
    %v185 = vld [vmem:[#allocation9 + $0x8] sm:$0xf]
    %v186 = vld [vmem:[#allocation9 + $0xc] sm:$0xf]
    %v187 = vld [vmem:[#allocation9 + $0x10] sm:$0xf]
    %v188 = vld [vmem:[#allocation9 + $0x14] sm:$0xf]
    %v189 = vld [vmem:[#allocation9 + $0x18] sm:$0xf]
    %v190 = vld [vmem:[#allocation9 + $0x1c] sm:$0xf]
    %v191 = vld [vmem:[#allocation9 + $0x20] sm:$0xf]
    %v192 = vld [vmem:[#allocation9 + $0x24] sm:$0xf]
    %v193 = vld [vmem:[#allocation9 + $0x28] sm:$0xf]
    %v194 = vld [vmem:[#allocation9 + $0x2c] sm:$0xf]
    %v195 = vld [vmem:[#allocation9 + $0x30] sm:$0xf]
    %v196 = vld [vmem:[#allocation9 + $0x34] sm:$0xf]
    %v197 = vld [vmem:[#allocation9 + $0x38] sm:$0xf]
    %v198 = vld [vmem:[#allocation9 + $0x3c] sm:$0xf]
    %v199 = vld [vmem:[%s5] sm:$0x1]
    %v201 = vlaneseq
    %v202 = vshrl.u32 %v201, 7
    %v203 = vsub.s32 0, %v202
    %v204 = vrot.slane %v199, %v203
    %v222 = vunpack.c.l.b16 %v183
    %v223 = vunpack.c.l.b16 %v184
    %v224 = vunpack.c.l.b16 %v185
    %v225 = vunpack.c.l.b16 %v186
    %v226 = vunpack.c.l.b16 %v187
    %v227 = vunpack.c.l.b16 %v188
    %v228 = vunpack.c.l.b16 %v189
    %v229 = vunpack.c.l.b16 %v190
    %v230 = vunpack.c.l.b16 %v191
    %v231 = vunpack.c.l.b16 %v192
    %v232 = vunpack.c.l.b16 %v193
    %v233 = vunpack.c.l.b16 %v194
    %v234 = vunpack.c.l.b16 %v195
    %v235 = vunpack.c.l.b16 %v196
    %v236 = vunpack.c.l.b16 %v197
    %v237 = vunpack.c.l.b16 %v198
    %v238 = vpack.c.b16 %v223, %v222
    %v239 = vpack.c.b16 %v225, %v224
    %v240 = vpack.c.b16 %v227, %v226
    %v241 = vpack.c.b16 %v229, %v228
    %v242 = vpack.c.b16 %v231, %v230
    %v243 = vpack.c.b16 %v233, %v232
    %v244 = vpack.c.b16 %v235, %v234
    %v245 = vpack.c.b16 %v237, %v236
    %254 = vmatprep.subr.bf16.mxu0 0
    %255 = vmatpush1.bf16.msra.mxu0 %v245
    %256 = vmatprep.subr.bf16.mxu0 0
    %257 = vmatpush1.bf16.msra.mxu0 %v244
    %258 = vmatprep.subr.bf16.mxu0 0
    %259 = vmatpush1.bf16.msra.mxu0 %v243
    %260 = vmatprep.subr.bf16.mxu0 0
    %261 = vmatpush1.bf16.msra.mxu0 %v242
    %262 = vmatprep.subr.bf16.mxu0 0
    %263 = vmatpush1.bf16.msra.mxu0 %v241
    %264 = vmatprep.subr.bf16.mxu0 0
    %265 = vmatpush1.bf16.msra.mxu0 %v240
    %266 = vmatprep.subr.bf16.mxu0 0
    %267 = vmatpush1.bf16.msra.mxu0 %v239
    %268 = vmatprep.subr.bf16.mxu0 0
    %269 = vmatpush1.bf16.msra.mxu0 %v238
    %270 = vmatprep.subr.bf16.mxu0 0
    %271 = vmatpush2.bf16.msra.mxu0 0
    %272 = vmatprep.subr.bf16.mxu0 0
    %273 = vmatpush2.bf16.msra.mxu0 0
    %274 = vmatprep.subr.bf16.mxu0 0
    %275 = vmatpush2.bf16.msra.mxu0 0
    %276 = vmatprep.subr.bf16.mxu0 0
    %277 = vmatpush2.bf16.msra.mxu0 0
    %278 = vmatprep.subr.bf16.mxu0 0
    %279 = vmatpush2.bf16.msra.mxu0 0
    %280 = vmatprep.subr.bf16.mxu0 0
    %281 = vmatpush2.bf16.msra.mxu0 0
    %282 = vmatprep.subr.bf16.mxu0 0
    %283 = vmatpush2.bf16.msra.mxu0 0
    %284 = vmatprep.subr.bf16.mxu0 0
    %285 = vmatpush2.bf16.msra.mxu0 0
    %286 = vmatprep.mubr.bf16.mxu0 0
    %287 = vmatmul.mubr.bf16.gmra.mxu0 %v182
    %v288 = vpop.f32.mrf.mxu0
    %v289 = vadd.f32 %v204, %v288
    %v290 = vpop.f32.mrf.mxu0
    %v291 = vpop.f32.mrf.mxu0
    %v292 = vadd.f32 %v204, %v291
    %v293 = vpop.f32.mrf.mxu0
    %294 = vdwg.mxu0
    %v295 = vadd.f32 %v289, %v65
    %v296 = vadd.f32 %v292, %v66
    %s297 = smul.u32 0, 16
    %s298 = sld [smem:[#allocation3]]
    %v299 = vlaneseq
    %v300 = vshrl.u32 %v299, 7
    %v301 = vadd.s32 %v300, 8
    %v302 = vstv %s297
    %v303 = vadd.s32 %v300, %v302
    %v304 = vadd.s32 %v301, %v302
    %v305 = vlaneseq
    %v306 = vand.u32 %v305, 127
    %v307 = vmul.u32 %v303, 128
    %v308 = vmul.u32 %v304, 128
    %v309 = vadd.s32 %v307, %v306
    %v310 = vadd.s32 %v308, %v306
    %v311 = vmul.u32 %v309, 2654435761
    %v312 = vmul.u32 %v310, 2654435761
    %s313 = smul.u32 %s298, 2246822519
    %v314 = vstv %s313
    %v315 = vadd.s32 %v311, %v314
    %v316 = vadd.s32 %v312, %v314
    %v317 = vshrl.u32 %v315, 16
    %v318 = vshrl.u32 %v316, 16
    %v319 = vxor.u32 %v315, %v317
    %v320 = vxor.u32 %v316, %v318
    %v321 = vmul.u32 %v319, 2146121005
    %v322 = vmul.u32 %v320, 2146121005
    %v323 = vshrl.u32 %v321, 15
    %v324 = vshrl.u32 %v322, 15
    %v325 = vxor.u32 %v321, %v323
    %v326 = vxor.u32 %v322, %v324
    %v327 = vmul.u32 %v325, 2221713035
    %v328 = vmul.u32 %v326, 2221713035
    %v329 = vshrl.u32 %v327, 16
    %v330 = vshrl.u32 %v328, 16
    %v331 = vxor.u32 %v327, %v329
    %v332 = vxor.u32 %v328, %v330
    %vm333 = vcmp.lt.u32.totalorder %v331, 2147483648
    %vm334 = vcmp.lt.u32.totalorder %v332, 2147483648
    %v335 = vmul.f32 %v295, 2.0
    %v336 = vmul.f32 %v296, 2.0
    %v337 = vsel %vm333, %v335, 0.0
    %v338 = vsel %vm334, %v336, 0.0
    %v339 = vmax.f32 %v337, 0.0
    %v340 = vmax.f32 %v338, 0.0
    %341 = vst [vmem:[#allocation10] sm:$0xff] %v339
    %342 = vst [vmem:[#allocation10 + $0x8] sm:$0xff] %v340
    // Predicated region
    $region34: #{tpu_custom_call.1} parent=1 // pred_check
      _
    $region35: #{tpu_custom_call.1} parent=1 // pred_check_branch
      %344 = sbr.rel (0) target = $region37
    $region36: #{tpu_custom_call.1} parent=1 // pred_region
      %s346 = ssub.s32 256, 256
      %347 = vsyncadd [#allocation6], %s346
      %s348 = sshll.u32 [#allocation10], 4
      %s349 = int_to_ptr.vmem [resolvable:$true] %s348
      %354 = dma.vmem_to_hbm [thread:$0]  %s349, 256, %s6, [#allocation6], 128, 128, 8
    $region37: #{tpu_custom_call.1} parent=1 // pred_fallthru
      _
    // Predicated region
    $region38: #{tpu_custom_call.1} parent=1 // pred_check
      _
    $region39: #{tpu_custom_call.1} parent=1 // pred_check_branch
      %356 = sbr.rel (0) target = $region41
    $region40: #{tpu_custom_call.1} parent=1 // pred_region
      %357 = dma.done [#allocation6], 256
    $region41: #{tpu_custom_call.1} parent=1 // pred_fallthru
      _
    %358 = vsyncpa [#allocation5], 1
    %359 = vsyncpa [#allocation8], 1
    %360 = vsyncpa [#allocation6], 1

</llo_original>
